<compile_context>
chip_gen: v6e
topology: v6e:2x2x1
jax: 0.10.0
libtpu: 0.0.40
codegen_flags: <defaults>
</compile_context>

<pallas_src>
import jax
import jax.numpy as jnp
from jax.experimental import pallas as pl
from jax.experimental.pallas import tpu as pltpu


def _round_up(x, mult):
    return ((x + mult - 1) // mult) * mult


# ---------------------------------------------------------------------------
# Kernel: whole 3-layer MLP fused, tiled over the row (batch*time) dimension.
# ---------------------------------------------------------------------------
def _discriminator_kernel(x_ref, w1_ref, b1_ref, w2_ref, b2_ref,
                          w3_ref, b3_ref, o_ref):
    # Input cast fused into the kernel (VPU cast, hidden under MXU work).
    x = x_ref[...].astype(jnp.bfloat16)                          # (tm, N) bf16

    # Layer 1: Linear(num_nodes -> 512) + LeakyReLU(0.2).
    # bf16 x bf16 MXU matmul, f32 accumulate; bias/activation in f32, then
    # immediately down-cast so only the bf16 (tm, 512) intermediate stays live.
    h1 = jnp.dot(x, w1_ref[...], preferred_element_type=jnp.float32) + b1_ref[...]
    h1 = jnp.where(h1 > 0, h1, 0.2 * h1).astype(jnp.bfloat16)

    # Layer 2: Linear(512 -> 256) + LeakyReLU(0.2).
    h2 = jnp.dot(h1, w2_ref[...], preferred_element_type=jnp.float32) + b2_ref[...]
    h2 = jnp.where(h2 > 0, h2, 0.2 * h2)

    # Layer 3: Linear(256 -> 1) + Sigmoid.  Output width is 1, so do a VPU
    # broadcast-multiply + XLU lane reduction instead of a 256x1 MXU matmul.
    h3 = jnp.sum(h2 * w3_ref[...], axis=-1, keepdims=True) + b3_ref[...]
    o_ref[...] = jax.nn.sigmoid(h3).astype(o_ref.dtype)


def _choose_row_tile(m, tm_max=2048):
    """Pick the row tile.

    - Large tile (up to 2048, multiple of 256) to amortize the ~0.35 us
      per-grid-step pipeline overhead (kernel is MXU-bound on the 512x256
      matmul).
    - Cap so the grid keeps >= ~4 steps: v7x has 2 TensorCores and
      dimension_semantics=("parallel",) only helps with multiple grid steps.
    - Shrink to the (8-aligned) array extent for tiny inputs; block rows must
      be a multiple of 8 (sublane) unless they equal the full extent.
    """
    tm = min(tm_max, _round_up(pl.cdiv(m, 4), 256))
    tm = max(tm, 256)
    tm = min(tm, _round_up(m, 8))
    return max(tm, 8)


def _mlp_pallas(x_flat, params):
    """Run the fused MLP on x_flat[M, N] (f32), row-tiled."""
    w1, b1, w2, b2, w3, b3 = params
    m, n = x_flat.shape

    tm = _choose_row_tile(m)
    grid = (pl.cdiv(m, tm),)

    # v5e's scoped-VMEM default (16 MiB) is too small for the large tile's
    # double-buffered x + f32/bf16 intermediates; 48 MiB is safe on every
    # generation (v7x physical VMEM is 64 MiB per TC).
    compiler_kwargs = dict(dimension_semantics=("parallel",))
    if tm >= 1024:
        compiler_kwargs["vmem_limit_bytes"] = 48 * 1024 * 1024

    out = pl.pallas_call(
        _discriminator_kernel,
        out_shape=jax.ShapeDtypeStruct((m, 1), jnp.float32),
        grid_spec=pltpu.PrefetchScalarGridSpec(
            num_scalar_prefetch=0,
            grid=grid,
            in_specs=[
                pl.BlockSpec((tm, n), lambda i: (i, 0)),    # x tile (f32; cast in-kernel)
                pl.BlockSpec(w1.shape, lambda i: (0, 0)),   # W1 [N,512]   bf16 (resident)
                pl.BlockSpec(b1.shape, lambda i: (0, 0)),   # b1 [1,512]   f32
                pl.BlockSpec(w2.shape, lambda i: (0, 0)),   # W2 [512,256] bf16
                pl.BlockSpec(b2.shape, lambda i: (0, 0)),   # b2 [1,256]   f32
                pl.BlockSpec(w3.shape, lambda i: (0, 0)),   # W3 row [1,256] f32 (VPU path)
                pl.BlockSpec(b3.shape, lambda i: (0, 0)),   # b3 [1,1]     f32
            ],
            out_specs=pl.BlockSpec((tm, 1), lambda i: (i, 0)),
        ),
        compiler_params=pltpu.CompilerParams(**compiler_kwargs),
    )(x_flat, w1, b1, w2, b2, w3, b3)

    return out


# ---------------------------------------------------------------------------
# Module wrapper mirroring the PyTorch forward.
# ---------------------------------------------------------------------------
def init_discriminator_params(num_nodes, key):
    """Init matching the PyTorch layer shapes.

    PyTorch Linear stores weight as [out, in]; W1/W2 are kept pre-transposed
    as [in, out] (bf16, MXU input format) so the kernel does x @ W + b.
    W3 is kept as its natural [1, 256] row because layer 3 runs on the VPU.
    """
    k1, k2, k3, k4, k5, k6 = jax.random.split(key, 6)

    def uniform(k, shape, fan_in):
        bound = 1.0 / jnp.sqrt(fan_in)
        return jax.random.uniform(k, shape, jnp.float32, -bound, bound)

    w1 = uniform(k1, (num_nodes, 512), num_nodes).astype(jnp.bfloat16)
    b1 = uniform(k2, (1, 512), num_nodes)
    w2 = uniform(k3, (512, 256), 512).astype(jnp.bfloat16)
    b2 = uniform(k4, (1, 256), 512)
    w3 = uniform(k5, (1, 256), 256)
    b3 = uniform(k6, (1, 1), 256)
    return (w1, b1, w2, b2, w3, b3)


def discriminator_forward(x, params):
    """x: any shape that, after squeeze(), is >=3-D with x.shape[2] == num_nodes
    (e.g. [B, 1, T, num_nodes]).  Matches torch's brittle .squeeze() semantics."""
    x = jnp.squeeze(x)                                  # drop all size-1 dims
    x_flat = x.reshape(-1, x.shape[2]).astype(jnp.float32)   # (-1, num_nodes)
    return _mlp_pallas(x_flat, params)                  # (M, 1) validity in [0, 1]


# Pure-JAX reference (same bf16-input / f32-accumulate numerics) for checking.
def _reference_forward(x, params):
    w1, b1, w2, b2, w3, b3 = params
    x = jnp.squeeze(x)
    xf = x.reshape(-1, x.shape[2])
    h1 = jnp.dot(xf.astype(jnp.bfloat16), w1,
                 preferred_element_type=jnp.float32) + b1
    h1 = jnp.where(h1 > 0, h1, 0.2 * h1).astype(jnp.bfloat16)
    h2 = jnp.dot(h1, w2, preferred_element_type=jnp.float32) + b2
    h2 = jnp.where(h2 > 0, h2, 0.2 * h2)
    h3 = jnp.sum(h2 * w3, axis=-1, keepdims=True) + b3
    return jax.nn.sigmoid(h3)


if __name__ == "__main__":
    key = jax.random.PRNGKey(0)
    k_param, k_x1, k_x2 = jax.random.split(key, 3)

    num_nodes = 16
    params = init_discriminator_params(num_nodes, k_param)

    # Small case: (B, 1, T, num_nodes); squeeze -> (B, T, N); M = B*T = 16.
    batch, seq = 2, 8
    x_small = jax.random.normal(k_x1, (batch, 1, seq, num_nodes), dtype=jnp.float32)
    out_small = jax.block_until_ready(discriminator_forward(x_small, params))
    ref_small = _reference_forward(x_small, params)
    assert out_small.shape == (batch * seq, 1), out_small.shape
    assert jnp.allclose(out_small, ref_small, atol=2e-3, rtol=2e-3), (
        float(jnp.max(jnp.abs(out_small - ref_small))))

    # Moderate case exercising multiple grid steps + a partial last row block.
    batch2, seq2 = 4, 300                               # M = 1200, tm = 512
    x_mid = jax.random.normal(k_x2, (batch2, 1, seq2, num_nodes), dtype=jnp.float32)
    out_mid = jax.block_until_ready(discriminator_forward(x_mid, params))
    ref_mid = _reference_forward(x_mid, params)
    assert out_mid.shape == (batch2 * seq2, 1), out_mid.shape
    assert jnp.allclose(out_mid, ref_mid, atol=2e-3, rtol=2e-3), (
        float(jnp.max(jnp.abs(out_mid - ref_mid))))

    print("KERNEL_OK")
</pallas_src>

<mosaic_0001>
module attributes {stable_mosaic.version = 11 : i64} {
  func.func @_discriminator_kernel(%arg0: i32, %arg1: memref<16x16xf32, #tpu.memory_space<vmem>>, %arg2: memref<16x512xbf16, #tpu.memory_space<vmem>>, %arg3: memref<1x512xf32, #tpu.memory_space<vmem>>, %arg4: memref<512x256xbf16, #tpu.memory_space<vmem>>, %arg5: memref<1x256xf32, #tpu.memory_space<vmem>>, %arg6: memref<1x256xf32, #tpu.memory_space<vmem>>, %arg7: memref<1x1xf32, #tpu.memory_space<vmem>>, %arg8: memref<16x1xf32, #tpu.memory_space<vmem>>) attributes {dimension_semantics = [#tpu.dimension_semantics<parallel>], iteration_bounds = array<i64: 1>, scalar_prefetch = 0 : i64, scratch_operands = 0 : i64, tpu.core_type = #tpu.core_type<tc>, window_params = [{transform_indices = @transform_0, window_bounds = array<i64: 16, 16>}, {pipeline_mode = #tpu.pipeline_mode<synchronous>, transform_indices = @transform_1, window_bounds = array<i64: 16, 512>}, {pipeline_mode = #tpu.pipeline_mode<synchronous>, transform_indices = @transform_2, window_bounds = array<i64: 1, 512>}, {pipeline_mode = #tpu.pipeline_mode<synchronous>, transform_indices = @transform_3, window_bounds = array<i64: 512, 256>}, {pipeline_mode = #tpu.pipeline_mode<synchronous>, transform_indices = @transform_4, window_bounds = array<i64: 1, 256>}, {pipeline_mode = #tpu.pipeline_mode<synchronous>, transform_indices = @transform_5, window_bounds = array<i64: 1, 256>}, {pipeline_mode = #tpu.pipeline_mode<synchronous>, transform_indices = @transform_6, window_bounds = array<i64: 1, 1>}, {transform_indices = @transform_7, window_bounds = array<i64: 16, 1>}]} {
    %c0 = arith.constant 0 : index
    %c0_0 = arith.constant 0 : index
    %0 = vector.load %arg1[%c0, %c0_0] : memref<16x16xf32, #tpu.memory_space<vmem>>, vector<16x16xf32>
    %1 = arith.truncf %0 : vector<16x16xf32> to vector<16x16xbf16>
    %c0_1 = arith.constant 0 : index
    %c0_2 = arith.constant 0 : index
    %2 = vector.load %arg2[%c0_1, %c0_2] : memref<16x512xbf16, #tpu.memory_space<vmem>>, vector<16x512xbf16>
    %cst = arith.constant dense<0.000000e+00> : vector<16x512xf32>
    %3 = tpu.matmul %1, %2, %cst {dimension_numbers = #tpu.dot_dimension_numbers<[1], [0], [0], [1], [0, 0, 1, 1], [], []>} : vector<16x16xbf16>, vector<16x512xbf16>, vector<16x512xf32> -> vector<16x512xf32>
    %c0_3 = arith.constant 0 : index
    %c0_4 = arith.constant 0 : index
    %4 = vector.load %arg3[%c0_3, %c0_4] : memref<1x512xf32, #tpu.memory_space<vmem>>, vector<1x512xf32>
    %5 = vector.broadcast %4 : vector<1x512xf32> to vector<16x512xf32>
    %6 = arith.addf %3, %5 : vector<16x512xf32>
    %cst_5 = arith.constant 0.000000e+00 : f32
    %7 = vector.broadcast %cst_5 : f32 to vector<16x512xf32>
    %8 = arith.cmpf ogt, %6, %7 : vector<16x512xf32>
    %cst_6 = arith.constant 2.000000e-01 : f32
    %9 = vector.broadcast %cst_6 : f32 to vector<16x512xf32>
    %10 = arith.mulf %9, %6 : vector<16x512xf32>
    %11 = arith.select %8, %6, %10 : vector<16x512xi1>, vector<16x512xf32>
    %12 = arith.truncf %11 : vector<16x512xf32> to vector<16x512xbf16>
    %c0_7 = arith.constant 0 : index
    %c0_8 = arith.constant 0 : index
    %13 = vector.load %arg4[%c0_7, %c0_8] : memref<512x256xbf16, #tpu.memory_space<vmem>>, vector<512x256xbf16>
    %cst_9 = arith.constant dense<0.000000e+00> : vector<16x256xf32>
    %14 = tpu.matmul %12, %13, %cst_9 {dimension_numbers = #tpu.dot_dimension_numbers<[1], [0], [0], [1], [0, 0, 1, 1], [], []>} : vector<16x512xbf16>, vector<512x256xbf16>, vector<16x256xf32> -> vector<16x256xf32>
    %c0_10 = arith.constant 0 : index
    %c0_11 = arith.constant 0 : index
    %15 = vector.load %arg5[%c0_10, %c0_11] : memref<1x256xf32, #tpu.memory_space<vmem>>, vector<1x256xf32>
    %16 = vector.broadcast %15 : vector<1x256xf32> to vector<16x256xf32>
    %17 = arith.addf %14, %16 : vector<16x256xf32>
    %cst_12 = arith.constant 0.000000e+00 : f32
    %18 = vector.broadcast %cst_12 : f32 to vector<16x256xf32>
    %19 = arith.cmpf ogt, %17, %18 : vector<16x256xf32>
    %cst_13 = arith.constant 2.000000e-01 : f32
    %20 = vector.broadcast %cst_13 : f32 to vector<16x256xf32>
    %21 = arith.mulf %20, %17 : vector<16x256xf32>
    %22 = arith.select %19, %17, %21 : vector<16x256xi1>, vector<16x256xf32>
    %c0_14 = arith.constant 0 : index
    %c0_15 = arith.constant 0 : index
    %23 = vector.load %arg6[%c0_14, %c0_15] : memref<1x256xf32, #tpu.memory_space<vmem>>, vector<1x256xf32>
    %24 = vector.broadcast %23 : vector<1x256xf32> to vector<16x256xf32>
    %25 = arith.mulf %22, %24 : vector<16x256xf32>
    %cst_16 = arith.constant dense<0.000000e+00> : vector<16xf32>
    %26 = vector.multi_reduction <add>, %25, %cst_16 [1] : vector<16x256xf32> to vector<16xf32>
    %27 = vector.shape_cast %26 : vector<16xf32> to vector<16x1xf32>
    %c0_17 = arith.constant 0 : index
    %c0_18 = arith.constant 0 : index
    %28 = vector.load %arg7[%c0_17, %c0_18] : memref<1x1xf32, #tpu.memory_space<vmem>>, vector<1x1xf32>
    %29 = vector.broadcast %28 : vector<1x1xf32> to vector<16x1xf32>
    %30 = arith.addf %27, %29 : vector<16x1xf32>
    %31 = arith.negf %30 : vector<16x1xf32>
    %32 = math.exp %31 : vector<16x1xf32>
    %cst_19 = arith.constant 1.000000e+00 : f32
    %33 = vector.broadcast %cst_19 : f32 to vector<16x1xf32>
    %34 = arith.addf %33, %32 : vector<16x1xf32>
    %35 = arith.divf %33, %34 : vector<16x1xf32>
    %c0_20 = arith.constant 0 : index
    %c0_21 = arith.constant 0 : index
    %36 = vector.load %arg8[%c0_20, %c0_21] : memref<16x1xf32, #tpu.memory_space<vmem>>, vector<16x1xf32>
    tpu.vector_store %arg8[%c0_20, %c0_21], %35 {strides = array<i32>} : memref<16x1xf32, #tpu.memory_space<vmem>>, vector<16x1xf32>,
    return
  }
  func.func @transform_0(%arg0: i32) -> (i32, i32) {
    %c0_i32 = arith.constant 0 : i32
    %c0_i32_0 = arith.constant 0 : i32
    return %arg0, %c0_i32 : i32, i32
  }
  func.func @transform_1(%arg0: i32) -> (i32, i32) {
    %c0_i32 = arith.constant 0 : i32
    %c0_i32_0 = arith.constant 0 : i32
    %c0_i32_1 = arith.constant 0 : i32
    return %c0_i32, %c0_i32_0 : i32, i32
  }
  func.func @transform_2(%arg0: i32) -> (i32, i32) {
    %c0_i32 = arith.constant 0 : i32
    %c0_i32_0 = arith.constant 0 : i32
    %c0_i32_1 = arith.constant 0 : i32
    return %c0_i32, %c0_i32_0 : i32, i32
  }
  func.func @transform_3(%arg0: i32) -> (i32, i32) {
    %c0_i32 = arith.constant 0 : i32
    %c0_i32_0 = arith.constant 0 : i32
    %c0_i32_1 = arith.constant 0 : i32
    return %c0_i32, %c0_i32_0 : i32, i32
  }
  func.func @transform_4(%arg0: i32) -> (i32, i32) {
    %c0_i32 = arith.constant 0 : i32
    %c0_i32_0 = arith.constant 0 : i32
    %c0_i32_1 = arith.constant 0 : i32
    return %c0_i32, %c0_i32_0 : i32, i32
  }
  func.func @transform_5(%arg0: i32) -> (i32, i32) {
    %c0_i32 = arith.constant 0 : i32
    %c0_i32_0 = arith.constant 0 : i32
    %c0_i32_1 = arith.constant 0 : i32
    return %c0_i32, %c0_i32_0 : i32, i32
  }
  func.func @transform_6(%arg0: i32) -> (i32, i32) {
    %c0_i32 = arith.constant 0 : i32
    %c0_i32_0 = arith.constant 0 : i32
    %c0_i32_1 = arith.constant 0 : i32
    return %c0_i32, %c0_i32_0 : i32, i32
  }
  func.func @transform_7(%arg0: i32) -> (i32, i32) {
    %c0_i32 = arith.constant 0 : i32
    %c0_i32_0 = arith.constant 0 : i32
    return %arg0, %c0_i32 : i32, i32
  }
}

</mosaic_0001>

<llo_original>
// kernel: tpu_custom_call.1
$region0: #{tpu_custom_call.1}
  #allocation0 [shape = 'u32[]', space=smem, size = 0x4, offset = 0x4, fixed_abs, tag = 'smem constant byte address 0x4 - core index']
  #allocation1 [shape = 'u32[144,128]{1,0:T(1,128)}', space=vmem, size = 0x12000, scoped, tag = 'internal scratch']
  #allocation2 [shape = 'f32[1,1]{1,0:T(1,128)S(1)}', space=vmem, size = 0x200, scoped, tag = 'scoped memory for tpu_custom_call.1']
  %s0 = inlined_call_operand.hbm [shape: f32[16,16], index: 0, kind: input, shape index: {}]
  %s1 = inlined_call_operand.hbm [shape: bf16[16,512], index: 1, kind: input, shape index: {}]
  %s2 = inlined_call_operand.vmem [shape: f32[1,512], index: 2, kind: input, shape index: {}]
  %s3 = inlined_call_operand.hbm [shape: bf16[512,256], index: 3, kind: input, shape index: {}]
  %s4 = inlined_call_operand.vmem [shape: f32[1,256], index: 4, kind: input, shape index: {}]
  %s5 = inlined_call_operand.vmem [shape: f32[1,256], index: 5, kind: input, shape index: {}]
  %s6 = inlined_call_operand.<no memory space> [shape: f32[1,1], index: 6, kind: input, shape index: {}]
  %s7 = inlined_call_operand.vmem [shape: f32[16,1], index: 7, kind: output, shape index: {}]
  %s8 = sld [smem:[#allocation0]]
  $region50: #{tpu_custom_call.1} parent=0
    _
  %s10 = ssub.s32 1, %s8
  %s11 = scalar_select 0, %s10, %s8
  %v12 = vstv %s6
  %13 = vst [vmem:[#allocation2] sm:$0x1] %v12
  $region1: #{tpu_custom_call.1} parent=0
    #allocation3 [shape = 'u8[8192]{0}', space=vmem, size = 0x2000, scoped, tag = 'input window, operand 0, single buffered']
    #allocation4 [shape = 's32[1]{0}', space=sflag, size = 0x4, scoped, tag = 'scoped memory for tpu_custom_call.1']
    #allocation5 [shape = 'u8[16384]{0}', space=vmem, size = 0x4000, scoped, tag = 'input window, operand 1, single buffered']
    #allocation6 [shape = 's32[1]{0}', space=sflag, size = 0x4, scoped, tag = 'scoped memory for tpu_custom_call.1']
    #allocation7 [shape = 'u8[262144]{0}', space=vmem, size = 0x40000, scoped, tag = 'input window, operand 3, single buffered']
    %14 = vsyncpa [#allocation4], 0
    %15 = vsyncpa [#allocation6], 0
    // Predicated region
    $region2: #{tpu_custom_call.1} parent=1 // pred_check
      _
    $region3: #{tpu_custom_call.1} parent=1 // pred_check_branch
      %17 = sbr.rel (0) target = $region5
    $region4: #{tpu_custom_call.1} parent=1 // pred_region
      %s19 = ssub.s32 256, 256
      %20 = vsyncadd [#allocation4], %s19
      %s21 = sshll.u32 [#allocation3], 4
      %s22 = int_to_ptr.vmem [resolvable:$true] %s21
      %27 = dma.hbm_to_vmem [thread:$0]  %s0, 256, %s22, [#allocation4], 128, 128, 8
    $region5: #{tpu_custom_call.1} parent=1 // pred_fallthru
      _
    // Predicated region
    $region6: #{tpu_custom_call.1} parent=1 // pred_check
      _
    $region7: #{tpu_custom_call.1} parent=1 // pred_check_branch
      %29 = sbr.rel (0) target = $region9
    $region8: #{tpu_custom_call.1} parent=1 // pred_region
      %s31 = ssub.s32 512, 512
      %32 = vsyncadd [#allocation6], %s31
      %s33 = sshll.u32 [#allocation5], 4
      %s34 = int_to_ptr.vmem [resolvable:$true] %s33
      %39 = dma.hbm_to_vmem [thread:$0]  %s1, 512, %s34, [#allocation6], 256, 256, 16
    $region9: #{tpu_custom_call.1} parent=1 // pred_fallthru
      _
    // Predicated region
    $region10: #{tpu_custom_call.1} parent=1 // pred_check
      _
    $region11: #{tpu_custom_call.1} parent=1 // pred_check_branch
      %41 = sbr.rel (0) target = $region13
    $region12: #{tpu_custom_call.1} parent=1 // pred_region
      _
    $region13: #{tpu_custom_call.1} parent=1 // pred_fallthru
      _
    // Predicated region
    $region14: #{tpu_custom_call.1} parent=1 // pred_check
      _
    $region15: #{tpu_custom_call.1} parent=1 // pred_check_branch
      %43 = sbr.rel (0) target = $region17
    $region16: #{tpu_custom_call.1} parent=1 // pred_region
      %s45 = ssub.s32 8192, 8192
      %46 = vsyncadd [#allocation6], %s45
      %s47 = sshll.u32 [#allocation7], 4
      %s48 = int_to_ptr.vmem [resolvable:$true] %s47
      %53 = dma.hbm_to_vmem [thread:$0]  %s3, 8192, %s48, [#allocation6], 128, 128, 8
    $region17: #{tpu_custom_call.1} parent=1 // pred_fallthru
      _
    // Predicated region
    $region18: #{tpu_custom_call.1} parent=1 // pred_check
      _
    $region19: #{tpu_custom_call.1} parent=1 // pred_check_branch
      %55 = sbr.rel (0) target = $region21
    $region20: #{tpu_custom_call.1} parent=1 // pred_region
      _
    $region21: #{tpu_custom_call.1} parent=1 // pred_fallthru
      _
    // Predicated region
    $region22: #{tpu_custom_call.1} parent=1 // pred_check
      _
    $region23: #{tpu_custom_call.1} parent=1 // pred_check_branch
      %57 = sbr.rel (0) target = $region25
    $region24: #{tpu_custom_call.1} parent=1 // pred_region
      _
    $region25: #{tpu_custom_call.1} parent=1 // pred_fallthru
      _
    // Predicated region
    $region26: #{tpu_custom_call.1} parent=1 // pred_check
      _
    $region27: #{tpu_custom_call.1} parent=1 // pred_check_branch
      %59 = sbr.rel (0) target = $region29
    $region28: #{tpu_custom_call.1} parent=1 // pred_region
      _
    $region29: #{tpu_custom_call.1} parent=1 // pred_fallthru
      _
    // Predicated region
    $region30: #{tpu_custom_call.1} parent=1 // pred_check
      _
    $region31: #{tpu_custom_call.1} parent=1 // pred_check_branch
      %61 = sbr.rel (0) target = $region33
    $region32: #{tpu_custom_call.1} parent=1 // pred_region
      %62 = dma.done [#allocation4], 256
    $region33: #{tpu_custom_call.1} parent=1 // pred_fallthru
      _
    // Predicated region
    $region34: #{tpu_custom_call.1} parent=1 // pred_check
      _
    $region35: #{tpu_custom_call.1} parent=1 // pred_check_branch
      %64 = sbr.rel (0) target = $region37
    $region36: #{tpu_custom_call.1} parent=1 // pred_region
      %65 = dma.done [#allocation6], 512
    $region37: #{tpu_custom_call.1} parent=1 // pred_fallthru
      _
    // Predicated region
    $region38: #{tpu_custom_call.1} parent=1 // pred_check
      _
    $region39: #{tpu_custom_call.1} parent=1 // pred_check_branch
      %67 = sbr.rel (0) target = $region41
    $region40: #{tpu_custom_call.1} parent=1 // pred_region
      %68 = dma.done [#allocation6], 8192
    $region41: #{tpu_custom_call.1} parent=1 // pred_fallthru
      _
    %v70 = vld [vmem:[#allocation3] sm:$0xff]
    %v71 = vld [vmem:[#allocation3 + $0x8] sm:$0xff]
    %v72 = vpack.c.bf16 %v71, %v70
    %v73 = vld [vmem:[#allocation5] sm:$0xff]
    %v74 = vld [vmem:[#allocation5 + $0x8] sm:$0xff]
    %v75 = vld [vmem:[#allocation5 + $0x10] sm:$0xff]
    %v76 = vld [vmem:[#allocation5 + $0x18] sm:$0xff]
    %v77 = vld [vmem:[%s2] sm:$0xf]
    %v79 = vlaneseq
    %v80 = vshrl.u32 %v79, 7
    %v81 = vsub.s32 0, %v80
    %v82 = vrot.slane %v77, %v81
    %v83 = vlaneseq
    %v84 = vshrl.u32 %v83, 7
    %v85 = vsub.s32 1, %v84
    %v86 = vrot.slane %v77, %v85
    %v87 = vlaneseq
    %v88 = vshrl.u32 %v87, 7
    %v89 = vsub.s32 2, %v88
    %v90 = vrot.slane %v77, %v89
    %v91 = vlaneseq
    %v92 = vshrl.u32 %v91, 7
    %v93 = vsub.s32 3, %v92
    %v94 = vrot.slane %v77, %v93
    %v103 = vunpack.c.l.b16 %v73
    %v104 = vunpack.c.h.b16 %v73
    %v105 = vunpack.c.l.b16 %v74
    %v106 = vunpack.c.h.b16 %v74
    %v107 = vunpack.c.l.b16 %v75
    %v108 = vunpack.c.h.b16 %v75
    %v109 = vunpack.c.l.b16 %v76
    %v110 = vunpack.c.h.b16 %v76
    %v111 = vpack.c.b16 %v107, %v103
    %v112 = vpack.c.b16 %v108, %v104
    %v113 = vpack.c.b16 %v109, %v105
    %v114 = vpack.c.b16 %v110, %v106
    %vm119 = vcmask 130048
    %v121 = vsel %vm119, %v72, 0
    %123 = vmatprep.subr.bf16.mxu0 0
    %124 = vmatpush1.bf16.msra.mxu0 0
    %125 = vmatprep.subr.bf16.mxu0 0
    %126 = vmatpush1.bf16.msra.mxu0 0
    %127 = vmatprep.subr.bf16.mxu0 0
    %128 = vmatpush1.bf16.msra.mxu0 0
    %129 = vmatprep.subr.bf16.mxu0 0
    %130 = vmatpush1.bf16.msra.mxu0 0
    %131 = vmatprep.subr.bf16.mxu0 0
    %132 = vmatpush1.bf16.msra.mxu0 0
    %133 = vmatprep.subr.bf16.mxu0 0
    %134 = vmatpush1.bf16.msra.mxu0 0
    %135 = vmatprep.subr.bf16.mxu0 0
    %136 = vmatpush1.bf16.msra.mxu0 0
    %137 = vmatprep.subr.bf16.mxu0 %v112
    %138 = vmatpush1.bf16.msra.mxu0 %v111
    %139 = vmatprep.subr.bf16.mxu0 0
    %140 = vmatpush2.bf16.msra.mxu0 0
    %141 = vmatprep.subr.bf16.mxu0 0
    %142 = vmatpush2.bf16.msra.mxu0 0
    %143 = vmatprep.subr.bf16.mxu0 0
    %144 = vmatpush2.bf16.msra.mxu0 0
    %145 = vmatprep.subr.bf16.mxu0 0
    %146 = vmatpush2.bf16.msra.mxu0 0
    %147 = vmatprep.subr.bf16.mxu0 0
    %148 = vmatpush2.bf16.msra.mxu0 0
    %149 = vmatprep.subr.bf16.mxu0 0
    %150 = vmatpush2.bf16.msra.mxu0 0
    %151 = vmatprep.subr.bf16.mxu0 0
    %152 = vmatpush2.bf16.msra.mxu0 0
    %153 = vmatprep.subr.bf16.mxu0 0
    %154 = vmatpush2.bf16.msra.mxu0 0
    %155 = vmatprep.mubr.bf16.mxu0 0
    %156 = vmatmul.mubr.bf16.gmra.mxu0 %v121
    %v157 = vpop.f32.mrf.mxu0
    %v158 = vadd.f32 %v82, %v157
    %v159 = vpop.f32.mrf.mxu0
    %v160 = vadd.f32 %v86, %v159
    %v161 = vpop.f32.mrf.mxu0
    %v162 = vadd.f32 %v82, %v161
    %v163 = vpop.f32.mrf.mxu0
    %v164 = vadd.f32 %v86, %v163
    %165 = vdwg.mxu0
    %166 = vmatprep.subr.bf16.mxu0 0
    %167 = vmatpush1.bf16.msra.mxu0 0
    %168 = vmatprep.subr.bf16.mxu0 0
    %169 = vmatpush1.bf16.msra.mxu0 0
    %170 = vmatprep.subr.bf16.mxu0 0
    %171 = vmatpush1.bf16.msra.mxu0 0
    %172 = vmatprep.subr.bf16.mxu0 0
    %173 = vmatpush1.bf16.msra.mxu0 0
    %174 = vmatprep.subr.bf16.mxu0 0
    %175 = vmatpush1.bf16.msra.mxu0 0
    %176 = vmatprep.subr.bf16.mxu0 0
    %177 = vmatpush1.bf16.msra.mxu0 0
    %178 = vmatprep.subr.bf16.mxu0 0
    %179 = vmatpush1.bf16.msra.mxu0 0
    %180 = vmatprep.subr.bf16.mxu0 %v114
    %181 = vmatpush1.bf16.msra.mxu0 %v113
    %182 = vmatprep.subr.bf16.mxu0 0
    %183 = vmatpush2.bf16.msra.mxu0 0
    %184 = vmatprep.subr.bf16.mxu0 0
    %185 = vmatpush2.bf16.msra.mxu0 0
    %186 = vmatprep.subr.bf16.mxu0 0
    %187 = vmatpush2.bf16.msra.mxu0 0
    %188 = vmatprep.subr.bf16.mxu0 0
    %189 = vmatpush2.bf16.msra.mxu0 0
    %190 = vmatprep.subr.bf16.mxu0 0
    %191 = vmatpush2.bf16.msra.mxu0 0
    %192 = vmatprep.subr.bf16.mxu0 0
    %193 = vmatpush2.bf16.msra.mxu0 0
    %194 = vmatprep.subr.bf16.mxu0 0
    %195 = vmatpush2.bf16.msra.mxu0 0
    %196 = vmatprep.subr.bf16.mxu0 0
    %197 = vmatpush2.bf16.msra.mxu0 0
    %198 = vmatprep.mubr.bf16.mxu0 0
    %199 = vmatmul.mubr.bf16.gmra.mxu0 %v121
    %v200 = vpop.f32.mrf.mxu0
    %v201 = vadd.f32 %v90, %v200
    %v202 = vpop.f32.mrf.mxu0
    %v203 = vadd.f32 %v94, %v202
    %v204 = vpop.f32.mrf.mxu0
    %v205 = vadd.f32 %v90, %v204
    %v206 = vpop.f32.mrf.mxu0
    %v207 = vadd.f32 %v94, %v206
    %208 = vdwg.mxu0
    %vm209 = vcmp.gt.f32.partialorder %v158, 0.0
    %vm210 = vcmp.gt.f32.partialorder %v160, 0.0
    %vm211 = vcmp.gt.f32.partialorder %v201, 0.0
    %vm212 = vcmp.gt.f32.partialorder %v203, 0.0
    %vm213 = vcmp.gt.f32.partialorder %v162, 0.0
    %vm214 = vcmp.gt.f32.partialorder %v164, 0.0
    %vm215 = vcmp.gt.f32.partialorder %v205, 0.0
    %vm216 = vcmp.gt.f32.partialorder %v207, 0.0
    %v217 = vmul.f32 %v158, 0.2
    %v218 = vmul.f32 %v160, 0.2
    %v219 = vmul.f32 %v201, 0.2
    %v220 = vmul.f32 %v203, 0.2
    %v221 = vmul.f32 %v162, 0.2
    %v222 = vmul.f32 %v164, 0.2
    %v223 = vmul.f32 %v205, 0.2
    %v224 = vmul.f32 %v207, 0.2
    %v225 = vsel %vm209, %v158, %v217
    %v226 = vsel %vm210, %v160, %v218
    %v227 = vsel %vm211, %v201, %v219
    %v228 = vsel %vm212, %v203, %v220
    %v229 = vsel %vm213, %v162, %v221
    %v230 = vsel %vm214, %v164, %v222
    %v231 = vsel %vm215, %v205, %v223
    %v232 = vsel %vm216, %v207, %v224
    %v233 = vpack.c.bf16 %v229, %v225
    %v234 = vpack.c.bf16 %v230, %v226
    %v235 = vpack.c.bf16 %v231, %v227
    %v236 = vpack.c.bf16 %v232, %v228
    %v237 = vld [vmem:[#allocation7] sm:$0xff]
    %v238 = vld [vmem:[#allocation7 + $0x8] sm:$0xff]
    %v239 = vld [vmem:[#allocation7 + $0x10] sm:$0xff]
    %v240 = vld [vmem:[#allocation7 + $0x18] sm:$0xff]
    %v241 = vld [vmem:[#allocation7 + $0x20] sm:$0xff]
    %v242 = vld [vmem:[#allocation7 + $0x28] sm:$0xff]
    %v243 = vld [vmem:[#allocation7 + $0x30] sm:$0xff]
    %v244 = vld [vmem:[#allocation7 + $0x38] sm:$0xff]
    %v245 = vld [vmem:[#allocation7 + $0x40] sm:$0xff]
    %v246 = vld [vmem:[#allocation7 + $0x48] sm:$0xff]
    %v247 = vld [vmem:[#allocation7 + $0x50] sm:$0xff]
    %v248 = vld [vmem:[#allocation7 + $0x58] sm:$0xff]
    %v249 = vld [vmem:[#allocation7 + $0x60] sm:$0xff]
    %v250 = vld [vmem:[#allocation7 + $0x68] sm:$0xff]
    %v251 = vld [vmem:[#allocation7 + $0x70] sm:$0xff]
    %v252 = vld [vmem:[#allocation7 + $0x78] sm:$0xff]
    %v253 = vld [vmem:[#allocation7 + $0x80] sm:$0xff]
    %v254 = vld [vmem:[#allocation7 + $0x88] sm:$0xff]
    %v255 = vld [vmem:[#allocation7 + $0x90] sm:$0xff]
    %v256 = vld [vmem:[#allocation7 + $0x98] sm:$0xff]
    %v257 = vld [vmem:[#allocation7 + $0xa0] sm:$0xff]
    %v258 = vld [vmem:[#allocation7 + $0xa8] sm:$0xff]
    %v259 = vld [vmem:[#allocation7 + $0xb0] sm:$0xff]
    %v260 = vld [vmem:[#allocation7 + $0xb8] sm:$0xff]
    %v261 = vld [vmem:[#allocation7 + $0xc0] sm:$0xff]
    %v262 = vld [vmem:[#allocation7 + $0xc8] sm:$0xff]
    %v263 = vld [vmem:[#allocation7 + $0xd0] sm:$0xff]
    %v264 = vld [vmem:[#allocation7 + $0xd8] sm:$0xff]
    %v265 = vld [vmem:[#allocation7 + $0xe0] sm:$0xff]
    %v266 = vld [vmem:[#allocation7 + $0xe8] sm:$0xff]
    %v267 = vld [vmem:[#allocation7 + $0xf0] sm:$0xff]
    %v268 = vld [vmem:[#allocation7 + $0xf8] sm:$0xff]
    %v269 = vld [vmem:[#allocation7 + $0x100] sm:$0xff]
    %v270 = vld [vmem:[#allocation7 + $0x108] sm:$0xff]
    %v271 = vld [vmem:[#allocation7 + $0x110] sm:$0xff]
    %v272 = vld [vmem:[#allocation7 + $0x118] sm:$0xff]
    %v273 = vld [vmem:[#allocation7 + $0x120] sm:$0xff]
    %v274 = vld [vmem:[#allocation7 + $0x128] sm:$0xff]
    %v275 = vld [vmem:[#allocation7 + $0x130] sm:$0xff]
    %v276 = vld [vmem:[#allocation7 + $0x138] sm:$0xff]
    %v277 = vld [vmem:[#allocation7 + $0x140] sm:$0xff]
    %v278 = vld [vmem:[#allocation7 + $0x148] sm:$0xff]
    %v279 = vld [vmem:[#allocation7 + $0x150] sm:$0xff]
    %v280 = vld [vmem:[#allocation7 + $0x158] sm:$0xff]
    %v281 = vld [vmem:[#allocation7 + $0x160] sm:$0xff]
    %v282 = vld [vmem:[#allocation7 + $0x168] sm:$0xff]
    %v283 = vld [vmem:[#allocation7 + $0x170] sm:$0xff]
    %v284 = vld [vmem:[#allocation7 + $0x178] sm:$0xff]
    %v285 = vld [vmem:[#allocation7 + $0x180] sm:$0xff]
    %v286 = vld [vmem:[#allocation7 + $0x188] sm:$0xff]
    %v287 = vld [vmem:[#allocation7 + $0x190] sm:$0xff]
    %v288 = vld [vmem:[#allocation7 + $0x198] sm:$0xff]
    %v289 = vld [vmem:[#allocation7 + $0x1a0] sm:$0xff]
    %v290 = vld [vmem:[#allocation7 + $0x1a8] sm:$0xff]
    %v291 = vld [vmem:[#allocation7 + $0x1b0] sm:$0xff]
    %v292 = vld [vmem:[#allocation7 + $0x1b8] sm:$0xff]
    %v293 = vld [vmem:[#allocation7 + $0x1c0] sm:$0xff]
    %v294 = vld [vmem:[#allocation7 + $0x1c8] sm:$0xff]
    %v295 = vld [vmem:[#allocation7 + $0x1d0] sm:$0xff]
    %v296 = vld [vmem:[#allocation7 + $0x1d8] sm:$0xff]
    %v297 = vld [vmem:[#allocation7 + $0x1e0] sm:$0xff]
    %v298 = vld [vmem:[#allocation7 + $0x1e8] sm:$0xff]
    %v299 = vld [vmem:[#allocation7 + $0x1f0] sm:$0xff]
    %v300 = vld [vmem:[#allocation7 + $0x1f8] sm:$0xff]
    %v301 = vld [vmem:[%s4] sm:$0x3]
    %v303 = vlaneseq
    %v304 = vshrl.u32 %v303, 7
    %v305 = vsub.s32 0, %v304
    %v306 = vrot.slane %v301, %v305
    %v307 = vlaneseq
    %v308 = vshrl.u32 %v307, 7
    %v309 = vsub.s32 1, %v308
    %v310 = vrot.slane %v301, %v309
    %v377 = vunpack.c.l.b16 %v237
    %v378 = vunpack.c.h.b16 %v237
    %v379 = vunpack.c.l.b16 %v238
    %v380 = vunpack.c.h.b16 %v238
    %v381 = vunpack.c.l.b16 %v239
    %v382 = vunpack.c.h.b16 %v239
    %v383 = vunpack.c.l.b16 %v240
    %v384 = vunpack.c.h.b16 %v240
    %v385 = vunpack.c.l.b16 %v241
    %v386 = vunpack.c.h.b16 %v241
    %v387 = vunpack.c.l.b16 %v242
    %v388 = vunpack.c.h.b16 %v242
    %v389 = vunpack.c.l.b16 %v243
    %v390 = vunpack.c.h.b16 %v243
    %v391 = vunpack.c.l.b16 %v244
    %v392 = vunpack.c.h.b16 %v244
    %v393 = vunpack.c.l.b16 %v245
    %v394 = vunpack.c.h.b16 %v245
    %v395 = vunpack.c.l.b16 %v246
    %v396 = vunpack.c.h.b16 %v246
    %v397 = vunpack.c.l.b16 %v247
    %v398 = vunpack.c.h.b16 %v247
    %v399 = vunpack.c.l.b16 %v248
    %v400 = vunpack.c.h.b16 %v248
    %v401 = vunpack.c.l.b16 %v249
    %v402 = vunpack.c.h.b16 %v249
    %v403 = vunpack.c.l.b16 %v250
    %v404 = vunpack.c.h.b16 %v250
    %v405 = vunpack.c.l.b16 %v251
    %v406 = vunpack.c.h.b16 %v251
    %v407 = vunpack.c.l.b16 %v252
    %v408 = vunpack.c.h.b16 %v252
    %v409 = vunpack.c.l.b16 %v253
    %v410 = vunpack.c.h.b16 %v253
    %v411 = vunpack.c.l.b16 %v254
    %v412 = vunpack.c.h.b16 %v254
    %v413 = vunpack.c.l.b16 %v255
    %v414 = vunpack.c.h.b16 %v255
    %v415 = vunpack.c.l.b16 %v256
    %v416 = vunpack.c.h.b16 %v256
    %v417 = vunpack.c.l.b16 %v257
    %v418 = vunpack.c.h.b16 %v257
    %v419 = vunpack.c.l.b16 %v258
    %v420 = vunpack.c.h.b16 %v258
    %v421 = vunpack.c.l.b16 %v259
    %v422 = vunpack.c.h.b16 %v259
    %v423 = vunpack.c.l.b16 %v260
    %v424 = vunpack.c.h.b16 %v260
    %v425 = vunpack.c.l.b16 %v261
    %v426 = vunpack.c.h.b16 %v261
    %v427 = vunpack.c.l.b16 %v262
    %v428 = vunpack.c.h.b16 %v262
    %v429 = vunpack.c.l.b16 %v263
    %v430 = vunpack.c.h.b16 %v263
    %v431 = vunpack.c.l.b16 %v264
    %v432 = vunpack.c.h.b16 %v264
    %v433 = vunpack.c.l.b16 %v265
    %v434 = vunpack.c.h.b16 %v265
    %v435 = vunpack.c.l.b16 %v266
    %v436 = vunpack.c.h.b16 %v266
    %v437 = vunpack.c.l.b16 %v267
    %v438 = vunpack.c.h.b16 %v267
    %v439 = vunpack.c.l.b16 %v268
    %v440 = vunpack.c.h.b16 %v268
    %v441 = vunpack.c.l.b16 %v269
    %v442 = vunpack.c.h.b16 %v269
    %v443 = vunpack.c.l.b16 %v270
    %v444 = vunpack.c.h.b16 %v270
    %v445 = vunpack.c.l.b16 %v271
    %v446 = vunpack.c.h.b16 %v271
    %v447 = vunpack.c.l.b16 %v272
    %v448 = vunpack.c.h.b16 %v272
    %v449 = vunpack.c.l.b16 %v273
    %v450 = vunpack.c.h.b16 %v273
    %v451 = vunpack.c.l.b16 %v274
    %v452 = vunpack.c.h.b16 %v274
    %v453 = vunpack.c.l.b16 %v275
    %v454 = vunpack.c.h.b16 %v275
    %v455 = vunpack.c.l.b16 %v276
    %v456 = vunpack.c.h.b16 %v276
    %v457 = vunpack.c.l.b16 %v277
    %v458 = vunpack.c.h.b16 %v277
    %v459 = vunpack.c.l.b16 %v278
    %v460 = vunpack.c.h.b16 %v278
    %v461 = vunpack.c.l.b16 %v279
    %v462 = vunpack.c.h.b16 %v279
    %v463 = vunpack.c.l.b16 %v280
    %v464 = vunpack.c.h.b16 %v280
    %v465 = vunpack.c.l.b16 %v281
    %v466 = vunpack.c.h.b16 %v281
    %v467 = vunpack.c.l.b16 %v282
    %v468 = vunpack.c.h.b16 %v282
    %v469 = vunpack.c.l.b16 %v283
    %v470 = vunpack.c.h.b16 %v283
    %v471 = vunpack.c.l.b16 %v284
    %v472 = vunpack.c.h.b16 %v284
    %v473 = vunpack.c.l.b16 %v285
    %v474 = vunpack.c.h.b16 %v285
    %v475 = vunpack.c.l.b16 %v286
    %v476 = vunpack.c.h.b16 %v286
    %v477 = vunpack.c.l.b16 %v287
    %v478 = vunpack.c.h.b16 %v287
    %v479 = vunpack.c.l.b16 %v288
    %v480 = vunpack.c.h.b16 %v288
    %v481 = vunpack.c.l.b16 %v289
    %v482 = vunpack.c.h.b16 %v289
    %v483 = vunpack.c.l.b16 %v290
    %v484 = vunpack.c.h.b16 %v290
    %v485 = vunpack.c.l.b16 %v291
    %v486 = vunpack.c.h.b16 %v291
    %v487 = vunpack.c.l.b16 %v292
    %v488 = vunpack.c.h.b16 %v292
    %v489 = vunpack.c.l.b16 %v293
    %v490 = vunpack.c.h.b16 %v293
    %v491 = vunpack.c.l.b16 %v294
    %v492 = vunpack.c.h.b16 %v294
    %v493 = vunpack.c.l.b16 %v295
    %v494 = vunpack.c.h.b16 %v295
    %v495 = vunpack.c.l.b16 %v296
    %v496 = vunpack.c.h.b16 %v296
    %v497 = vunpack.c.l.b16 %v297
    %v498 = vunpack.c.h.b16 %v297
    %v499 = vunpack.c.l.b16 %v298
    %v500 = vunpack.c.h.b16 %v298
    %v501 = vunpack.c.l.b16 %v299
    %v502 = vunpack.c.h.b16 %v299
    %v503 = vunpack.c.l.b16 %v300
    %v504 = vunpack.c.h.b16 %v300
    %v505 = vpack.c.b16 %v379, %v377
    %v506 = vpack.c.b16 %v380, %v378
    %v507 = vpack.c.b16 %v383, %v381
    %v508 = vpack.c.b16 %v384, %v382
    %v509 = vpack.c.b16 %v387, %v385
    %v510 = vpack.c.b16 %v388, %v386
    %v511 = vpack.c.b16 %v391, %v389
    %v512 = vpack.c.b16 %v392, %v390
    %v513 = vpack.c.b16 %v395, %v393
    %v514 = vpack.c.b16 %v396, %v394
    %v515 = vpack.c.b16 %v399, %v397
    %v516 = vpack.c.b16 %v400, %v398
    %v517 = vpack.c.b16 %v403, %v401
    %v518 = vpack.c.b16 %v404, %v402
    %v519 = vpack.c.b16 %v407, %v405
    %v520 = vpack.c.b16 %v408, %v406
    %v521 = vpack.c.b16 %v411, %v409
    %v522 = vpack.c.b16 %v412, %v410
    %v523 = vpack.c.b16 %v415, %v413
    %v524 = vpack.c.b16 %v416, %v414
    %v525 = vpack.c.b16 %v419, %v417
    %v526 = vpack.c.b16 %v420, %v418
    %v527 = vpack.c.b16 %v423, %v421
    %v528 = vpack.c.b16 %v424, %v422
    %v529 = vpack.c.b16 %v427, %v425
    %v530 = vpack.c.b16 %v428, %v426
    %v531 = vpack.c.b16 %v431, %v429
    %v532 = vpack.c.b16 %v432, %v430
    %v533 = vpack.c.b16 %v435, %v433
    %v534 = vpack.c.b16 %v436, %v434
    %v535 = vpack.c.b16 %v439, %v437
    %v536 = vpack.c.b16 %v440, %v438
    %v537 = vpack.c.b16 %v443, %v441
    %v538 = vpack.c.b16 %v444, %v442
    %v539 = vpack.c.b16 %v447, %v445
    %v540 = vpack.c.b16 %v448, %v446
    %v541 = vpack.c.b16 %v451, %v449
    %v542 = vpack.c.b16 %v452, %v450
    %v543 = vpack.c.b16 %v455, %v453
    %v544 = vpack.c.b16 %v456, %v454
    %v545 = vpack.c.b16 %v459, %v457
    %v546 = vpack.c.b16 %v460, %v458
    %v547 = vpack.c.b16 %v463, %v461
    %v548 = vpack.c.b16 %v464, %v462
    %v549 = vpack.c.b16 %v467, %v465
    %v550 = vpack.c.b16 %v468, %v466
    %v551 = vpack.c.b16 %v471, %v469
    %v552 = vpack.c.b16 %v472, %v470
    %v553 = vpack.c.b16 %v475, %v473
    %v554 = vpack.c.b16 %v476, %v474
    %v555 = vpack.c.b16 %v479, %v477
    %v556 = vpack.c.b16 %v480, %v478
    %v557 = vpack.c.b16 %v483, %v481
    %v558 = vpack.c.b16 %v484, %v482
    %v559 = vpack.c.b16 %v487, %v485
    %v560 = vpack.c.b16 %v488, %v486
    %v561 = vpack.c.b16 %v491, %v489
    %v562 = vpack.c.b16 %v492, %v490
    %v563 = vpack.c.b16 %v495, %v493
    %v564 = vpack.c.b16 %v496, %v494
    %v565 = vpack.c.b16 %v499, %v497
    %v566 = vpack.c.b16 %v500, %v498
    %v567 = vpack.c.b16 %v503, %v501
    %v568 = vpack.c.b16 %v504, %v502
    %633 = vmatprep.subr.bf16.mxu0 %v520
    %634 = vmatpush1.bf16.msra.mxu0 %v519
    %635 = vmatprep.subr.bf16.mxu0 %v518
    %636 = vmatpush1.bf16.msra.mxu0 %v517
    %637 = vmatprep.subr.bf16.mxu0 %v516
    %638 = vmatpush1.bf16.msra.mxu0 %v515
    %639 = vmatprep.subr.bf16.mxu0 %v514
    %640 = vmatpush1.bf16.msra.mxu0 %v513
    %641 = vmatprep.subr.bf16.mxu0 %v512
    %642 = vmatpush1.bf16.msra.mxu0 %v511
    %643 = vmatprep.subr.bf16.mxu0 %v510
    %644 = vmatpush1.bf16.msra.mxu0 %v509
    %645 = vmatprep.subr.bf16.mxu0 %v508
    %646 = vmatpush1.bf16.msra.mxu0 %v507
    %647 = vmatprep.subr.bf16.mxu0 %v506
    %648 = vmatpush1.bf16.msra.mxu0 %v505
    %649 = vmatprep.subr.bf16.mxu0 %v536
    %650 = vmatpush2.bf16.msra.mxu0 %v535
    %651 = vmatprep.subr.bf16.mxu0 %v534
    %652 = vmatpush2.bf16.msra.mxu0 %v533
    %653 = vmatprep.subr.bf16.mxu0 %v532
    %654 = vmatpush2.bf16.msra.mxu0 %v531
    %655 = vmatprep.subr.bf16.mxu0 %v530
    %656 = vmatpush2.bf16.msra.mxu0 %v529
    %657 = vmatprep.subr.bf16.mxu0 %v528
    %658 = vmatpush2.bf16.msra.mxu0 %v527
    %659 = vmatprep.subr.bf16.mxu0 %v526
    %660 = vmatpush2.bf16.msra.mxu0 %v525
    %661 = vmatprep.subr.bf16.mxu0 %v524
    %662 = vmatpush2.bf16.msra.mxu0 %v523
    %663 = vmatprep.subr.bf16.mxu0 %v522
    %664 = vmatpush2.bf16.msra.mxu0 %v521
    %665 = vmatprep.mubr.bf16.mxu0 %v234
    %666 = vmatmul.mubr.bf16.gmra.mxu0 %v233
    %v667 = vpop.f32.mrf.mxu0
    %v668 = vadd.f32 %v306, %v667
    %v669 = vpop.f32.mrf.mxu0
    %v670 = vadd.f32 %v310, %v669
    %v671 = vpop.f32.mrf.mxu0
    %v672 = vadd.f32 %v306, %v671
    %v673 = vpop.f32.mrf.mxu0
    %v674 = vadd.f32 %v310, %v673
    %675 = vdwg.mxu0
    %676 = vmatprep.subr.bf16.mxu0 %v552
    %677 = vmatpush1.bf16.msra.mxu0 %v551
    %678 = vmatprep.subr.bf16.mxu0 %v550
    %679 = vmatpush1.bf16.msra.mxu0 %v549
    %680 = vmatprep.subr.bf16.mxu0 %v548
    %681 = vmatpush1.bf16.msra.mxu0 %v547
    %682 = vmatprep.subr.bf16.mxu0 %v546
    %683 = vmatpush1.bf16.msra.mxu0 %v545
    %684 = vmatprep.subr.bf16.mxu0 %v544
    %685 = vmatpush1.bf16.msra.mxu0 %v543
    %686 = vmatprep.subr.bf16.mxu0 %v542
    %687 = vmatpush1.bf16.msra.mxu0 %v541
    %688 = vmatprep.subr.bf16.mxu0 %v540
    %689 = vmatpush1.bf16.msra.mxu0 %v539
    %690 = vmatprep.subr.bf16.mxu0 %v538
    %691 = vmatpush1.bf16.msra.mxu0 %v537
    %692 = vmatprep.subr.bf16.mxu0 %v568
    %693 = vmatpush2.bf16.msra.mxu0 %v567
    %694 = vmatprep.subr.bf16.mxu0 %v566
    %695 = vmatpush2.bf16.msra.mxu0 %v565
    %696 = vmatprep.subr.bf16.mxu0 %v564
    %697 = vmatpush2.bf16.msra.mxu0 %v563
    %698 = vmatprep.subr.bf16.mxu0 %v562
    %699 = vmatpush2.bf16.msra.mxu0 %v561
    %700 = vmatprep.subr.bf16.mxu0 %v560
    %701 = vmatpush2.bf16.msra.mxu0 %v559
    %702 = vmatprep.subr.bf16.mxu0 %v558
    %703 = vmatpush2.bf16.msra.mxu0 %v557
    %704 = vmatprep.subr.bf16.mxu0 %v556
    %705 = vmatpush2.bf16.msra.mxu0 %v555
    %706 = vmatprep.subr.bf16.mxu0 %v554
    %707 = vmatpush2.bf16.msra.mxu0 %v553
    %708 = vmatprep.mubr.bf16.mxu0 %v236
    %709 = vmatmul.mubr.bf16.gmra.mxu0 %v235
    %v710 = vpop.f32.mrf.mxu0
    %v711 = vadd.f32 %v668, %v710
    %v712 = vpop.f32.mrf.mxu0
    %v713 = vadd.f32 %v670, %v712
    %v714 = vpop.f32.mrf.mxu0
    %v715 = vadd.f32 %v672, %v714
    %v716 = vpop.f32.mrf.mxu0
    %v717 = vadd.f32 %v674, %v716
    %718 = vdwg.mxu0
    %vm719 = vcmp.gt.f32.partialorder %v711, 0.0
    %vm720 = vcmp.gt.f32.partialorder %v713, 0.0
    %vm721 = vcmp.gt.f32.partialorder %v715, 0.0
    %vm722 = vcmp.gt.f32.partialorder %v717, 0.0
    %v723 = vmul.f32 %v711, 0.2
    %v724 = vmul.f32 %v713, 0.2
    %v725 = vmul.f32 %v715, 0.2
    %v726 = vmul.f32 %v717, 0.2
    %v727 = vsel %vm719, %v711, %v723
    %v728 = vsel %vm720, %v713, %v724
    %v729 = vsel %vm721, %v715, %v725
    %v730 = vsel %vm722, %v717, %v726
    %v731 = vld [vmem:[%s5] sm:$0x3]
    %v733 = vlaneseq
    %v734 = vshrl.u32 %v733, 7
    %v735 = vsub.s32 0, %v734
    %v736 = vrot.slane %v731, %v735
    %v737 = vlaneseq
    %v738 = vshrl.u32 %v737, 7
    %v739 = vsub.s32 1, %v738
    %v740 = vrot.slane %v731, %v739
    %v743 = vmul.f32 %v727, %v736
    %v744 = vmul.f32 %v728, %v740
    %v745 = vmul.f32 %v729, %v736
    %v746 = vmul.f32 %v730, %v740
    %v747 = vadd.f32 %v743, %v744
    %748 = vadd.xlane.f32.xlu0 %v747
    %v749 = vpop.xlane.xlu0 %748
    %v750 = vadd.f32 %v745, %v746
    %751 = vadd.xlane.f32.xlu0 %v750
    %v752 = vpop.xlane.xlu0 %751
    %v753 = vld [vmem:[#allocation2] sm:$0x1]
    %v755 = vlaneseq
    %v756 = vshrl.u32 %v755, 7
    %v757 = vsub.s32 0, %v756
    %v758 = vrot.slane %v753, %v757
    %v760 = vadd.f32 %v749, %v758
    %v761 = vadd.f32 %v752, %v758
    %v762 = vxor.u32 %v760, 2147483648
    %v763 = vxor.u32 %v761, 2147483648
    %v764 = vmul.f32 %v762, 1.442695
    %v765 = vpow.pop %v764
    %v766 = vmul.f32 %v763, 1.442695
    %v767 = vpow.pop %v766
    %v768 = vadd.f32 %v765, 1.0
    %v769 = vadd.f32 %v767, 1.0
    %v770 = vrcp.pop %v768
    %v771 = vmul.f32 1.0, %v770
    %v772 = vrcp.pop %v769
    %v773 = vmul.f32 1.0, %v772
    %vm774 = vcmask 7168
    %775 = vst.msk [vmem:[%s7] sm:$0xff] %vm774, %v771
    %776 = vst.msk [vmem:[%s7 + $0x8] sm:$0xff] %vm774, %v773
    // Predicated region
    $region42: #{tpu_custom_call.1} parent=1 // pred_check
      _
    $region43: #{tpu_custom_call.1} parent=1 // pred_check_branch
      %778 = sbr.rel (0) target = $region45
    $region44: #{tpu_custom_call.1} parent=1 // pred_region
      _
    $region45: #{tpu_custom_call.1} parent=1 // pred_fallthru
      _
    // Predicated region
    $region46: #{tpu_custom_call.1} parent=1 // pred_check
      _
    $region47: #{tpu_custom_call.1} parent=1 // pred_check_branch
      %780 = sbr.rel (0) target = $region49
    $region48: #{tpu_custom_call.1} parent=1 // pred_region
      _
    $region49: #{tpu_custom_call.1} parent=1 // pred_fallthru
      _
    %781 = vsyncpa [#allocation4], 1
    %782 = vsyncpa [#allocation6], 1

</llo_original>
